<compile_context>
chip_gen: v7x
topology: tpu7x:2x2x1
jax: 0.10.0
libtpu: 0.0.40
codegen_flags: <defaults>
</compile_context>

<pallas_src>
import math
import functools

import jax
import jax.numpy as jnp
from jax import lax
from jax.experimental import pallas as pl
from jax.experimental.pallas import tpu as pltpu


# ----------------------------------------------------------------------------
# Parameter / buffer construction (deterministic, matches PyTorch __init__)
# ----------------------------------------------------------------------------
def make_pos_embedding(emb_size: int, maxlen: int = 5000) -> jnp.ndarray:
    """Sin/cos positional table, shape [maxlen, 1, emb_size] (float32)."""
    den = jnp.exp(-jnp.arange(0, emb_size, 2, dtype=jnp.float32)
                  * math.log(10000.0) / emb_size)                  # [emb/2]
    pos = jnp.arange(0, maxlen, dtype=jnp.float32)[:, None]         # [maxlen, 1]
    pe = jnp.zeros((maxlen, emb_size), dtype=jnp.float32)
    pe = pe.at[:, 0::2].set(jnp.sin(pos * den))
    pe = pe.at[:, 1::2].set(jnp.cos(pos * den))
    return pe[:, None, :]                                           # [maxlen, 1, emb]


# ----------------------------------------------------------------------------
# Helpers
# ----------------------------------------------------------------------------
def _srl32(v, k: int):
    """Logical right shift for int32 vectors (arith shift + mask sign bits)."""
    return jnp.bitwise_and(jnp.right_shift(v, k),
                           jnp.int32((1 << (32 - k)) - 1))


def _choose_seq_tile(S: int, B: int, E: int, itemsize: int,
                     target_bytes: int) -> int:
    """Pick a seq tile: big enough to amortize grid overhead, small enough to
    keep x/out blocks ~target_bytes (v7x-safe), multiple of 8 (sublane) unless
    it covers the whole sequence."""
    rows = target_bytes // max(1, B * E * itemsize)
    if rows >= S:
        return S
    rows = max(8, (rows // 8) * 8)
    return min(rows, S)


# ----------------------------------------------------------------------------
# Kernels
# ----------------------------------------------------------------------------
def _posenc_add_kernel(x_ref, pe_ref, o_ref):
    # x_ref: [tS, B, E]   pe_ref: [tS, E] (same dtype as x)
    o_ref[...] = (x_ref[...] + pe_ref[...][:, None, :]).astype(o_ref.dtype)


def _posenc_dropout_kernel(seed_ref, x_ref, pe_ref, o_ref, *,
                           threshold24: int, keep_scale: float):
    # Training-mode inverted dropout.  Random bits come from a stateless
    # murmur-style hash of (seed, global element index): every tile and every
    # seed gets an independent mask, and it lowers on TPU and in interpret
    # mode (no pltpu.prng_* dependency).
    y = x_ref[...] + pe_ref[...][:, None, :]
    tS, B, E = x_ref.shape

    s_loc = lax.broadcasted_iota(jnp.int32, (tS, B, E), 0)
    b_loc = lax.broadcasted_iota(jnp.int32, (tS, B, E), 1)
    e_loc = lax.broadcasted_iota(jnp.int32, (tS, B, E), 2)
    s_glob = pl.program_id(0) * jnp.int32(tS) + s_loc
    idx = s_glob * jnp.int32(B * E) + b_loc * jnp.int32(E) + e_loc

    # murmur3 finalizer (constants as wrapped int32)
    h = idx * jnp.int32(-1640531535) + seed_ref[0] * jnp.int32(-1028477387)
    h = h ^ _srl32(h, 16)
    h = h * jnp.int32(-2048144789)
    h = h ^ _srl32(h, 13)
    h = h * jnp.int32(-1028477387)
    h = h ^ _srl32(h, 16)

    r = jnp.bitwise_and(h, jnp.int32(0x00FFFFFF))        # uniform in [0, 2^24)
    keep = r >= jnp.int32(threshold24)                   # integer threshold
    scale = jnp.asarray(keep_scale, dtype=y.dtype)
    o_ref[...] = jnp.where(keep, y * scale, jnp.zeros_like(y)).astype(o_ref.dtype)


# ----------------------------------------------------------------------------
# Wrapper
# ----------------------------------------------------------------------------
def positional_encoder(x: jnp.ndarray,
                       pos_embedding: jnp.ndarray,
                       *,
                       dropout_p: float = 0.1,
                       training: bool = False,
                       seed: int = 0,
                       block_bytes: int = 2 * 1024 * 1024) -> jnp.ndarray:
    """x: [seq_len, batch, emb]; pos_embedding: [maxlen, 1, emb]."""
    S, B, E = x.shape
    pe = pos_embedding[:S, 0, :].astype(x.dtype)          # [S, E], x's dtype

    tS = _choose_seq_tile(S, B, E, jnp.dtype(x.dtype).itemsize, block_bytes)
    grid = (pl.cdiv(S, tS),)

    x_spec = pl.BlockSpec((tS, B, E), lambda i: (i, 0, 0))
    pe_spec = pl.BlockSpec((tS, E), lambda i: (i, 0))      # indexed by seq only
    out_spec = pl.BlockSpec((tS, B, E), lambda i: (i, 0, 0))
    out_shape = jax.ShapeDtypeStruct((S, B, E), x.dtype)
    cparams = pltpu.CompilerParams(dimension_semantics=("parallel",))
    # NOTE: input_output_aliases={0: 0} (x -> out) can be added when the
    # caller donates x; left off so x stays valid for eager callers.

    if not training or dropout_p == 0.0:
        # Eval-mode dropout is the identity.
        return pl.pallas_call(
            _posenc_add_kernel,
            out_shape=out_shape,
            grid=grid,
            in_specs=[x_spec, pe_spec],
            out_specs=out_spec,
            compiler_params=cparams,
        )(x, pe)

    if not (0.0 <= dropout_p < 1.0):
        raise ValueError("dropout_p must be in [0, 1) for the training path")

    threshold24 = min(int(round(float(dropout_p) * (1 << 24))), (1 << 24) - 1)
    keep_scale = 1.0 / (1.0 - float(dropout_p))
    seed_arr = jnp.array([seed], dtype=jnp.int32)

    return pl.pallas_call(
        functools.partial(_posenc_dropout_kernel,
                          threshold24=threshold24, keep_scale=keep_scale),
        out_shape=out_shape,
        grid=grid,
        in_specs=[pl.BlockSpec(memory_space=pltpu.MemorySpace.SMEM),
                  x_spec, pe_spec],
        out_specs=out_spec,
        compiler_params=cparams,
    )(seed_arr, x, pe)


# ----------------------------------------------------------------------------
# Demo / correctness check
# ----------------------------------------------------------------------------
if __name__ == "__main__":
    SEQ, BATCH, EMB = 16, 8, 128      # small, sublane/lane-dense demo shape
    MAXLEN = 64                        # module default is 5000

    key = jax.random.PRNGKey(0)
    x = jax.random.normal(key, (SEQ, BATCH, EMB), dtype=jnp.float32)
    pos_embedding = make_pos_embedding(EMB, MAXLEN)        # [maxlen, 1, emb]

    # Eval-mode forward (dropout = identity), deterministic reference path.
    out = positional_encoder(x, pos_embedding, dropout_p=0.1, training=False)
    out = jax.block_until_ready(out)

    ref = x + pos_embedding[:SEQ, :, :]                    # broadcast over batch
    assert out.shape == (SEQ, BATCH, EMB)
    assert out.dtype == x.dtype
    assert jnp.allclose(out, ref, atol=1e-6, rtol=1e-6)

    # Training-mode (stochastic inverted dropout) kernel.
    p = 0.1
    out_train = positional_encoder(x, pos_embedding, dropout_p=p,
                                   training=True, seed=123)
    out_train = jax.block_until_ready(out_train)
    assert out_train.shape == (SEQ, BATCH, EMB)
    drop_frac = float(jnp.mean(out_train == 0))
    assert 0.02 <= drop_frac <= 0.25, f"unexpected drop fraction {drop_frac}"
    kept = out_train != 0
    expected_kept = ref * jnp.float32(1.0 / (1.0 - p))
    assert jnp.allclose(jnp.where(kept, out_train, 0.0),
                        jnp.where(kept, expected_kept, 0.0),
                        atol=1e-5, rtol=1e-5)
    # TODO(synk): PyTorch's dropout RNG stream cannot be bit-matched; the
    # training path is statistically equivalent (inverted dropout) only.

    print("KERNEL_OK")
</pallas_src>

<mosaic_0001>
module attributes {stable_mosaic.version = 11 : i64} {
  func.func @_posenc_add_kernel(%arg0: i32, %arg1: memref<16x8x128xf32, #tpu.memory_space<vmem>>, %arg2: memref<16x128xf32, #tpu.memory_space<vmem>>, %arg3: memref<16x8x128xf32, #tpu.memory_space<vmem>>) attributes {dimension_semantics = [#tpu.dimension_semantics<parallel>], iteration_bounds = array<i64: 1>, scalar_prefetch = 0 : i64, scratch_operands = 0 : i64, tpu.core_type = #tpu.core_type<tc>, window_params = [{transform_indices = @transform_0, window_bounds = array<i64: 16, 8, 128>}, {transform_indices = @transform_1, window_bounds = array<i64: 16, 128>}, {transform_indices = @transform_2, window_bounds = array<i64: 16, 8, 128>}]} {
    %c0 = arith.constant 0 : index
    %c0_0 = arith.constant 0 : index
    %c0_1 = arith.constant 0 : index
    %0 = vector.load %arg1[%c0, %c0_0, %c0_1] : memref<16x8x128xf32, #tpu.memory_space<vmem>>, vector<16x8x128xf32>
    %c0_2 = arith.constant 0 : index
    %c0_3 = arith.constant 0 : index
    %1 = vector.load %arg2[%c0_2, %c0_3] : memref<16x128xf32, #tpu.memory_space<vmem>>, vector<16x128xf32>
    %2 = vector.shape_cast %1 : vector<16x128xf32> to vector<16x1x128xf32>
    %3 = vector.broadcast %2 : vector<16x1x128xf32> to vector<16x8x128xf32>
    %4 = arith.addf %0, %3 : vector<16x8x128xf32>
    %c0_4 = arith.constant 0 : index
    %c0_5 = arith.constant 0 : index
    %c0_6 = arith.constant 0 : index
    %5 = vector.load %arg3[%c0_4, %c0_5, %c0_6] : memref<16x8x128xf32, #tpu.memory_space<vmem>>, vector<16x8x128xf32>
    tpu.vector_store %arg3[%c0_4, %c0_5, %c0_6], %4 {strides = array<i32>} : memref<16x8x128xf32, #tpu.memory_space<vmem>>, vector<16x8x128xf32>,
    return
  }
  func.func @transform_0(%arg0: i32) -> (i32, i32, i32) {
    %c0_i32 = arith.constant 0 : i32
    %c0_i32_0 = arith.constant 0 : i32
    %c0_i32_1 = arith.constant 0 : i32
    return %arg0, %c0_i32, %c0_i32_0 : i32, i32, i32
  }
  func.func @transform_1(%arg0: i32) -> (i32, i32) {
    %c0_i32 = arith.constant 0 : i32
    %c0_i32_0 = arith.constant 0 : i32
    return %arg0, %c0_i32 : i32, i32
  }
  func.func @transform_2(%arg0: i32) -> (i32, i32, i32) {
    %c0_i32 = arith.constant 0 : i32
    %c0_i32_0 = arith.constant 0 : i32
    %c0_i32_1 = arith.constant 0 : i32
    return %arg0, %c0_i32, %c0_i32_0 : i32, i32, i32
  }
}

</mosaic_0001>

<llo_original>
// kernel: tpu_custom_call.1
$region0: #{tpu_custom_call.1}
  #allocation0 [shape = 'u32[]', space=smem, size = 0x4, offset = 0x4, fixed_abs, tag = 'smem constant byte address 0x4 - core index']
  #allocation1 [shape = 'u32[144,128]{1,0:T(1,128)}', space=vmem, size = 0x12000, scoped, tag = 'internal scratch']
  %s0 = inlined_call_operand.hbm [shape: f32[16,8,128], index: 0, kind: input, shape index: {}]
  %s1 = inlined_call_operand.hbm [shape: f32[16,128], index: 1, kind: input, shape index: {}]
  %s2 = inlined_call_operand.hbm [shape: f32[16,8,128], index: 2, kind: output, shape index: {}]
  %s3 = sld [smem:[#allocation0]]
  $region26: #{tpu_custom_call.1} parent=0
    _
  %s5 = ssub.s32 1, %s3
  %s6 = scalar_select 0, %s5, %s3
  $region1: #{tpu_custom_call.1} parent=0
    #allocation2 [shape = 'u8[65536]{0}', space=vmem, size = 0x10000, scoped, tag = 'input window, operand 0, single buffered']
    #allocation3 [shape = 's32[1]{0}', space=sflag, size = 0x4, scoped, tag = 'scoped memory for tpu_custom_call.1']
    #allocation4 [shape = 's32[1]{0}', space=sflag, size = 0x4, scoped, tag = 'scoped memory for tpu_custom_call.1']
    #allocation5 [shape = 'u8[8192]{0}', space=vmem, size = 0x2000, scoped, tag = 'input window, operand 1, single buffered']
    #allocation6 [shape = 's32[1]{0}', space=sflag, size = 0x4, scoped, tag = 'scoped memory for tpu_custom_call.1']
    #allocation7 [shape = 'u8[65536]{0}', space=vmem, size = 0x10000, scoped, tag = 'output window, operand 0, single buffered']
    %7 = vsyncpa [#allocation3], 0
    %8 = vsyncpa [#allocation6], 0
    %9 = vsyncpa [#allocation4], 0
    // Predicated region
    $region2: #{tpu_custom_call.1} parent=1 // pred_check
      _
    $region3: #{tpu_custom_call.1} parent=1 // pred_check_branch
      %11 = sbr.rel (0) target = $region5
    $region4: #{tpu_custom_call.1} parent=1 // pred_region
      %s13 = ssub.s32 2048, 2048
      %14 = vsyncadd [#allocation3], %s13
      %s15 = sshll.u32 [#allocation2], 4
      %s16 = int_to_ptr.vmem [resolvable:$true] %s15
      %21 = dma.hbm_to_vmem [thread:$0]  %s0, 2048, %s16, [#allocation3], 128, 128, 8
    $region5: #{tpu_custom_call.1} parent=1 // pred_fallthru
      _
    // Predicated region
    $region6: #{tpu_custom_call.1} parent=1 // pred_check
      _
    $region7: #{tpu_custom_call.1} parent=1 // pred_check_branch
      %23 = sbr.rel (0) target = $region9
    $region8: #{tpu_custom_call.1} parent=1 // pred_region
      %s25 = ssub.s32 256, 256
      %26 = vsyncadd [#allocation6], %s25
      %s27 = sshll.u32 [#allocation5], 4
      %s28 = int_to_ptr.vmem [resolvable:$true] %s27
      %33 = dma.hbm_to_vmem [thread:$0]  %s1, 256, %s28, [#allocation6], 128, 128, 8
    $region9: #{tpu_custom_call.1} parent=1 // pred_fallthru
      _
    // Predicated region
    $region10: #{tpu_custom_call.1} parent=1 // pred_check
      _
    $region11: #{tpu_custom_call.1} parent=1 // pred_check_branch
      %35 = sbr.rel (0) target = $region13
    $region12: #{tpu_custom_call.1} parent=1 // pred_region
      %36 = dma.done [#allocation3], 2048
    $region13: #{tpu_custom_call.1} parent=1 // pred_fallthru
      _
    // Predicated region
    $region14: #{tpu_custom_call.1} parent=1 // pred_check
      _
    $region15: #{tpu_custom_call.1} parent=1 // pred_check_branch
      %38 = sbr.rel (0) target = $region17
    $region16: #{tpu_custom_call.1} parent=1 // pred_region
      %39 = dma.done [#allocation6], 256
    $region17: #{tpu_custom_call.1} parent=1 // pred_fallthru
      _
    %v40 = vld [vmem:[#allocation2] sm:$0xff]
    %v41 = vld [vmem:[#allocation2 + $0x8] sm:$0xff]
    %v42 = vld [vmem:[#allocation2 + $0x10] sm:$0xff]
    %v43 = vld [vmem:[#allocation2 + $0x18] sm:$0xff]
    %v44 = vld [vmem:[#allocation2 + $0x20] sm:$0xff]
    %v45 = vld [vmem:[#allocation2 + $0x28] sm:$0xff]
    %v46 = vld [vmem:[#allocation2 + $0x30] sm:$0xff]
    %v47 = vld [vmem:[#allocation2 + $0x38] sm:$0xff]
    %v48 = vld [vmem:[#allocation2 + $0x40] sm:$0xff]
    %v49 = vld [vmem:[#allocation2 + $0x48] sm:$0xff]
    %v50 = vld [vmem:[#allocation2 + $0x50] sm:$0xff]
    %v51 = vld [vmem:[#allocation2 + $0x58] sm:$0xff]
    %v52 = vld [vmem:[#allocation2 + $0x60] sm:$0xff]
    %v53 = vld [vmem:[#allocation2 + $0x68] sm:$0xff]
    %v54 = vld [vmem:[#allocation2 + $0x70] sm:$0xff]
    %v55 = vld [vmem:[#allocation2 + $0x78] sm:$0xff]
    %v56 = vld [vmem:[#allocation5] sm:$0xff]
    %v57 = vld [vmem:[#allocation5 + $0x8] sm:$0xff]
    %v60 = vcombine.high %v56, %v56
    %v62 = vunpack.c.l.s4 1966171168
    %v63 = vunpack.c.0.s8 %v62
    %v64 = vlaneseq
    %v65 = vshrl.u32 %v64, 7
    %v66 = vsub.s32 %v63, %v65
    %v67 = vrot.slane %v56, %v66
    %v69 = vunpack.c.l.s4 1966171168
    %v70 = vunpack.c.0.s8 %v69
    %v71 = vlaneseq
    %v72 = vshrl.u32 %v71, 7
    %v73 = vsub.s32 %v70, %v72
    %v74 = vrot.slane %v60, %v73
    %v75 = vcombine.high %v67, %v67
    %v76 = vcombine.high %v74, %v74
    %v78 = vunpack.c.l.s4 1966171168
    %v79 = vunpack.c.0.s8 %v78
    %v80 = vlaneseq
    %v81 = vshrl.u32 %v80, 7
    %v82 = vsub.s32 %v79, %v81
    %v83 = vrot.slane %v67, %v82
    %v85 = vunpack.c.l.s4 1966171168
    %v86 = vunpack.c.0.s8 %v85
    %v87 = vlaneseq
    %v88 = vshrl.u32 %v87, 7
    %v89 = vsub.s32 %v86, %v88
    %v90 = vrot.slane %v74, %v89
    %v92 = vunpack.c.l.s4 1966171168
    %v93 = vunpack.c.0.s8 %v92
    %v94 = vlaneseq
    %v95 = vshrl.u32 %v94, 7
    %v96 = vsub.s32 %v93, %v95
    %v97 = vrot.slane %v75, %v96
    %v99 = vunpack.c.l.s4 1966171168
    %v100 = vunpack.c.0.s8 %v99
    %v101 = vlaneseq
    %v102 = vshrl.u32 %v101, 7
    %v103 = vsub.s32 %v100, %v102
    %v104 = vrot.slane %v76, %v103
    %v105 = vcombine.high %v83, %v83
    %v106 = vcombine.high %v90, %v90
    %v107 = vcombine.high %v97, %v97
    %v108 = vcombine.high %v104, %v104
    %v109 = vcombine.high %v57, %v57
    %v111 = vunpack.c.l.s4 1966171168
    %v112 = vunpack.c.0.s8 %v111
    %v113 = vlaneseq
    %v114 = vshrl.u32 %v113, 7
    %v115 = vsub.s32 %v112, %v114
    %v116 = vrot.slane %v57, %v115
    %v118 = vunpack.c.l.s4 1966171168
    %v119 = vunpack.c.0.s8 %v118
    %v120 = vlaneseq
    %v121 = vshrl.u32 %v120, 7
    %v122 = vsub.s32 %v119, %v121
    %v123 = vrot.slane %v109, %v122
    %v124 = vcombine.high %v116, %v116
    %v125 = vcombine.high %v123, %v123
    %v127 = vunpack.c.l.s4 1966171168
    %v128 = vunpack.c.0.s8 %v127
    %v129 = vlaneseq
    %v130 = vshrl.u32 %v129, 7
    %v131 = vsub.s32 %v128, %v130
    %v132 = vrot.slane %v116, %v131
    %v134 = vunpack.c.l.s4 1966171168
    %v135 = vunpack.c.0.s8 %v134
    %v136 = vlaneseq
    %v137 = vshrl.u32 %v136, 7
    %v138 = vsub.s32 %v135, %v137
    %v139 = vrot.slane %v123, %v138
    %v141 = vunpack.c.l.s4 1966171168
    %v142 = vunpack.c.0.s8 %v141
    %v143 = vlaneseq
    %v144 = vshrl.u32 %v143, 7
    %v145 = vsub.s32 %v142, %v144
    %v146 = vrot.slane %v124, %v145
    %v148 = vunpack.c.l.s4 1966171168
    %v149 = vunpack.c.0.s8 %v148
    %v150 = vlaneseq
    %v151 = vshrl.u32 %v150, 7
    %v152 = vsub.s32 %v149, %v151
    %v153 = vrot.slane %v125, %v152
    %v154 = vcombine.high %v132, %v132
    %v155 = vcombine.high %v139, %v139
    %v156 = vcombine.high %v146, %v146
    %v157 = vcombine.high %v153, %v153
    %v158 = vlaneseq
    %v159 = vshrl.u32 %v158, 7
    %v160 = vsub.s32 0, %v159
    %v161 = vrot.slane %v83, %v160
    %v162 = vlaneseq
    %v163 = vshrl.u32 %v162, 7
    %v164 = vsub.s32 0, %v163
    %v165 = vrot.slane %v97, %v164
    %v166 = vlaneseq
    %v167 = vshrl.u32 %v166, 7
    %v168 = vsub.s32 0, %v167
    %v169 = vrot.slane %v105, %v168
    %v170 = vlaneseq
    %v171 = vshrl.u32 %v170, 7
    %v172 = vsub.s32 0, %v171
    %v173 = vrot.slane %v107, %v172
    %v174 = vlaneseq
    %v175 = vshrl.u32 %v174, 7
    %v176 = vsub.s32 0, %v175
    %v177 = vrot.slane %v90, %v176
    %v178 = vlaneseq
    %v179 = vshrl.u32 %v178, 7
    %v180 = vsub.s32 0, %v179
    %v181 = vrot.slane %v104, %v180
    %v182 = vlaneseq
    %v183 = vshrl.u32 %v182, 7
    %v184 = vsub.s32 0, %v183
    %v185 = vrot.slane %v106, %v184
    %v186 = vlaneseq
    %v187 = vshrl.u32 %v186, 7
    %v188 = vsub.s32 0, %v187
    %v189 = vrot.slane %v108, %v188
    %v190 = vlaneseq
    %v191 = vshrl.u32 %v190, 7
    %v192 = vsub.s32 0, %v191
    %v193 = vrot.slane %v132, %v192
    %v194 = vlaneseq
    %v195 = vshrl.u32 %v194, 7
    %v196 = vsub.s32 0, %v195
    %v197 = vrot.slane %v146, %v196
    %v198 = vlaneseq
    %v199 = vshrl.u32 %v198, 7
    %v200 = vsub.s32 0, %v199
    %v201 = vrot.slane %v154, %v200
    %v202 = vlaneseq
    %v203 = vshrl.u32 %v202, 7
    %v204 = vsub.s32 0, %v203
    %v205 = vrot.slane %v156, %v204
    %v206 = vlaneseq
    %v207 = vshrl.u32 %v206, 7
    %v208 = vsub.s32 0, %v207
    %v209 = vrot.slane %v139, %v208
    %v210 = vlaneseq
    %v211 = vshrl.u32 %v210, 7
    %v212 = vsub.s32 0, %v211
    %v213 = vrot.slane %v153, %v212
    %v214 = vlaneseq
    %v215 = vshrl.u32 %v214, 7
    %v216 = vsub.s32 0, %v215
    %v217 = vrot.slane %v155, %v216
    %v218 = vlaneseq
    %v219 = vshrl.u32 %v218, 7
    %v220 = vsub.s32 0, %v219
    %v221 = vrot.slane %v157, %v220
    %v238 = vadd.f32 %v40, %v161
    %v239 = vadd.f32 %v41, %v165
    %v240 = vadd.f32 %v42, %v169
    %v241 = vadd.f32 %v43, %v173
    %v242 = vadd.f32 %v44, %v177
    %v243 = vadd.f32 %v45, %v181
    %v244 = vadd.f32 %v46, %v185
    %v245 = vadd.f32 %v47, %v189
    %v246 = vadd.f32 %v48, %v193
    %v247 = vadd.f32 %v49, %v197
    %v248 = vadd.f32 %v50, %v201
    %v249 = vadd.f32 %v51, %v205
    %v250 = vadd.f32 %v52, %v209
    %v251 = vadd.f32 %v53, %v213
    %v252 = vadd.f32 %v54, %v217
    %v253 = vadd.f32 %v55, %v221
    %254 = vst [vmem:[#allocation7] sm:$0xff] %v238
    %255 = vst [vmem:[#allocation7 + $0x8] sm:$0xff] %v239
    %256 = vst [vmem:[#allocation7 + $0x10] sm:$0xff] %v240
    %257 = vst [vmem:[#allocation7 + $0x18] sm:$0xff] %v241
    %258 = vst [vmem:[#allocation7 + $0x20] sm:$0xff] %v242
    %259 = vst [vmem:[#allocation7 + $0x28] sm:$0xff] %v243
    %260 = vst [vmem:[#allocation7 + $0x30] sm:$0xff] %v244
    %261 = vst [vmem:[#allocation7 + $0x38] sm:$0xff] %v245
    %262 = vst [vmem:[#allocation7 + $0x40] sm:$0xff] %v246
    %263 = vst [vmem:[#allocation7 + $0x48] sm:$0xff] %v247
    %264 = vst [vmem:[#allocation7 + $0x50] sm:$0xff] %v248
    %265 = vst [vmem:[#allocation7 + $0x58] sm:$0xff] %v249
    %266 = vst [vmem:[#allocation7 + $0x60] sm:$0xff] %v250
    %267 = vst [vmem:[#allocation7 + $0x68] sm:$0xff] %v251
    %268 = vst [vmem:[#allocation7 + $0x70] sm:$0xff] %v252
    %269 = vst [vmem:[#allocation7 + $0x78] sm:$0xff] %v253
    // Predicated region
    $region18: #{tpu_custom_call.1} parent=1 // pred_check
      _
    $region19: #{tpu_custom_call.1} parent=1 // pred_check_branch
      %271 = sbr.rel (0) target = $region21
    $region20: #{tpu_custom_call.1} parent=1 // pred_region
      %s273 = ssub.s32 2048, 2048
      %274 = vsyncadd [#allocation4], %s273
      %s275 = sshll.u32 [#allocation7], 4
      %s276 = int_to_ptr.vmem [resolvable:$true] %s275
      %281 = dma.vmem_to_hbm [thread:$0]  %s276, 2048, %s2, [#allocation4], 128, 128, 8
    $region21: #{tpu_custom_call.1} parent=1 // pred_fallthru
      _
    // Predicated region
    $region22: #{tpu_custom_call.1} parent=1 // pred_check
      _
    $region23: #{tpu_custom_call.1} parent=1 // pred_check_branch
      %283 = sbr.rel (0) target = $region25
    $region24: #{tpu_custom_call.1} parent=1 // pred_region
      %284 = dma.done [#allocation4], 2048
    $region25: #{tpu_custom_call.1} parent=1 // pred_fallthru
      _
    %285 = vsyncpa [#allocation3], 1
    %286 = vsyncpa [#allocation6], 1
    %287 = vsyncpa [#allocation4], 1

</llo_original>
